<compile_context>
chip_gen: v6e
topology: v6e:2x2x1
jax: 0.10.0
libtpu: 0.0.40
codegen_flags: <defaults>
</compile_context>

<pallas_src>
import jax
import jax.numpy as jnp
from jax import lax
from jax.experimental import pallas as pl
from jax.experimental.pallas import tpu as pltpu


def _logic_kernel(x_ref, ia_ref, ib_ref, c_ref, o_ref):
    """One (tile_b, tile_n) output tile of the logic layer.

    x_ref  : (TB, IN)  bf16/f32  input activations (full feature axis resident)
    ia_ref : (1, TN)   int32     index of operand `a` for each output gate
    ib_ref : (1, TN)   int32     index of operand `b` for each output gate
    c_ref  : (4, TN)   f32       collapsed op coefficients [c0, ca, cb, cab]
    o_ref  : (TB, TN)  f32       output
    """
    in_dim = x_ref.shape[1]
    tn = ia_ref.shape[1]

    x = x_ref[...]                                           # (TB, IN)

    # Fused gather: build one-hot selection matrices and run them on the MXU.
    # (x @ onehot)[t, n] == x[t, idx[n]] exactly (single nonzero per column).
    iota = lax.broadcasted_iota(jnp.int32, (in_dim, tn), 0)  # (IN, TN)
    sel_a = (iota == ia_ref[...]).astype(x.dtype)            # (IN, TN) one-hot
    sel_b = (iota == ib_ref[...]).astype(x.dtype)
    a = jnp.dot(x, sel_a, preferred_element_type=jnp.float32)   # (TB, TN) f32
    b = jnp.dot(x, sel_b, preferred_element_type=jnp.float32)

    # Collapsed bin_op_s: out = c0 + ca*a + cb*b + cab*(a*b)
    c = c_ref[...]                                           # (4, TN) f32
    out = c[0:1, :] + c[1:2, :] * a + c[2:3, :] * b + c[3:4, :] * (a * b)
    o_ref[...] = out.astype(o_ref.dtype)


def _collapse_op_weights(w):
    """Collapse the 16 op probabilities into 4 affine coefficients.

    Every difflogic op i is affine in {1, a, b, ab}; this is the exact
    refactoring sum_i w_i * op_i(a,b) = c0 + ca*a + cb*b + cab*ab.
    Done with elementwise f32 adds (no matmul) to avoid any TPU matmul
    precision demotion.  Returns (4, out_dim) float32.
    """
    w = w.astype(jnp.float32)
    c0 = (w[:, 8] + w[:, 9] + w[:, 10] + w[:, 11]
          + w[:, 12] + w[:, 13] + w[:, 14] + w[:, 15])
    ca = (w[:, 2] + w[:, 3] + w[:, 6] + w[:, 7]
          - w[:, 8] - w[:, 9] - w[:, 12] - w[:, 13])
    cb = (w[:, 4] + w[:, 5] + w[:, 6] + w[:, 7]
          - w[:, 8] - w[:, 9] - w[:, 10] - w[:, 11])
    cab = (w[:, 1] - w[:, 2] - w[:, 4] - 2.0 * w[:, 6] - w[:, 7]
           + w[:, 8] + 2.0 * w[:, 9] + w[:, 11] + w[:, 13] - w[:, 14])
    return jnp.stack([c0, ca, cb, cab], axis=0)              # (4, out_dim)


def _pick_tile(total, max_tile, quanta):
    """Largest divisor of `total` that is <= max_tile and a multiple of a quantum.

    Falls back to the full extent (a single block) if nothing fits, which is
    always legal (block == full array dim) and right for tiny problems.
    """
    if total <= max_tile:
        return total
    for q in quanta:
        t = (max_tile // q) * q
        while t >= q:
            if total % t == 0:
                return t
            t -= q
    return total


def logic_layer_forward(x, weights, idx_a, idx_b, *, training=True,
                        max_tile_n=512, max_tile_b=128,
                        operand_dtype=jnp.bfloat16):
    """Pallas implementation of LogicLayer.forward (python / mps path).

    x       : (B, in_dim)   float32
    weights : (out_dim, 16) float32 raw logits (the nn.Parameter)
    idx_a   : (out_dim,)    int32 connection indices (self.indices[0])
    idx_b   : (out_dim,)    int32 connection indices (self.indices[1])
    returns : (B, out_dim)  float32
    """
    B, in_dim = x.shape
    out_dim = weights.shape[0]
    assert weights.shape == (out_dim, 16)

    # Op mixture weights (softmax in training, hard argmax one-hot in eval).
    if training:
        w = jax.nn.softmax(weights.astype(jnp.float32), axis=-1)
    else:
        w = jax.nn.one_hot(jnp.argmax(weights, axis=-1), 16, dtype=jnp.float32)
    coeffs = _collapse_op_weights(w)                          # (4, out_dim) f32

    # Kernel operands. bf16 transport for x halves its HBM traffic; the one-hot
    # selection matmul reproduces the bf16 values exactly, mixing stays f32.
    x_k = x.astype(operand_dtype)                             # (B, in_dim)
    ia = idx_a.astype(jnp.int32).reshape(1, out_dim)
    ib = idx_b.astype(jnp.int32).reshape(1, out_dim)

    # Tile selection (sweepable). Cap tile_n so the in-kernel (in_dim, tile_n)
    # iota / one-hot selectors stay a couple of MiB — keeps total VMEM use
    # (double-buffered blocks + intermediates) well under the 32 MiB scoped
    # default on v5e/v6e and within v7x's smaller 64 MiB physical VMEM.
    sel_cap = max(128, ((2 << 20) // max(4 * in_dim, 1)) // 128 * 128)
    tile_n = _pick_tile(out_dim, min(max_tile_n, sel_cap), (128,))
    tile_b = _pick_tile(B, max_tile_b, (16, 8))
    grid = (B // tile_b, out_dim // tile_n)   # batch outer, out_dim inner

    out = pl.pallas_call(
        _logic_kernel,
        out_shape=jax.ShapeDtypeStruct((B, out_dim), jnp.float32),
        grid_spec=pltpu.PrefetchScalarGridSpec(
            num_scalar_prefetch=0,
            grid=grid,
            in_specs=[
                # x block: full feature axis, re-DMA'd only when the batch tile
                # changes (outer axis) — resident across all out_dim tiles.
                pl.BlockSpec((tile_b, in_dim), lambda bi, ji: (bi, 0)),
                pl.BlockSpec((1, tile_n), lambda bi, ji: (0, ji)),
                pl.BlockSpec((1, tile_n), lambda bi, ji: (0, ji)),
                pl.BlockSpec((4, tile_n), lambda bi, ji: (0, ji)),
            ],
            out_specs=pl.BlockSpec((tile_b, tile_n), lambda bi, ji: (bi, ji)),
        ),
        compiler_params=pltpu.CompilerParams(
            # Both axes fully independent -> shard across v7x's 2 TensorCores.
            dimension_semantics=("parallel", "parallel")),
    )(x_k, ia, ib, coeffs)
    return out


def _reference_forward(x, weights, idx_a, idx_b, training=True,
                       operand_dtype=jnp.float32):
    """Pure-JAX reference of LogicLayer.forward_python (16-op form).

    operand_dtype lets the test account for the kernel's bf16 transport of x.
    """
    if training:
        w = jax.nn.softmax(weights.astype(jnp.float32), axis=-1)
    else:
        w = jax.nn.one_hot(jnp.argmax(weights, axis=-1), 16, dtype=jnp.float32)
    a = x[:, idx_a].astype(operand_dtype).astype(jnp.float32)
    b = x[:, idx_b].astype(operand_dtype).astype(jnp.float32)
    ab = a * b
    ops = jnp.stack([
        jnp.zeros_like(a), ab, a - ab, a, b - ab, b,
        a + b - 2 * ab, a + b - ab, 1 - (a + b - ab), 1 - (a + b - 2 * ab),
        1 - b, 1 - b + ab, 1 - a, 1 - a + ab, 1 - ab, jnp.ones_like(a),
    ], axis=-1)                                      # (B, out_dim, 16)
    return jnp.sum(ops * w[None, :, :], axis=-1)     # (B, out_dim)


def make_random_connections(key, in_dim, out_dim):
    """Mirror of LogicLayer.get_connections('random')."""
    assert out_dim * 2 >= in_dim
    k1, k2 = jax.random.split(key)
    c = jax.random.permutation(k1, 2 * out_dim) % in_dim
    c = jax.random.permutation(k2, in_dim)[c].reshape(2, out_dim)
    return c[0].astype(jnp.int32), c[1].astype(jnp.int32)


# TODO(synk): PackBitsTensor eval paths (forward_cuda_eval / forward_metal_eval)
# are bit-packed integer kernels with no float semantics here; not translated.
# GradFactor only rescales gradients (forward is identity), so it is omitted.


if __name__ == "__main__":
    key = jax.random.PRNGKey(0)
    k_w, k_x, k_c = jax.random.split(key, 3)

    batch = 8
    in_dim = 64
    out_dim = 256

    weights = jax.random.normal(k_w, (out_dim, 16), dtype=jnp.float32)
    idx_a, idx_b = make_random_connections(k_c, in_dim, out_dim)
    x = jax.random.uniform(k_x, (batch, in_dim), dtype=jnp.float32)

    # Training mode (softmax-relaxed ops).
    out = logic_layer_forward(x, weights, idx_a, idx_b, training=True)
    out = jax.block_until_ready(out)
    assert out.shape == (batch, out_dim)

    # Tight check against a reference with the same bf16 transport of x.
    ref_bf16 = _reference_forward(x, weights, idx_a, idx_b, training=True,
                                  operand_dtype=jnp.bfloat16)
    assert jnp.allclose(out, ref_bf16, atol=1e-4, rtol=1e-4), \
        "mismatch vs bf16-transport reference (train)"

    # Loose check against the exact f32 PyTorch-semantics reference
    # (only difference is bf16 rounding of the gathered operands).
    ref_f32 = _reference_forward(x, weights, idx_a, idx_b, training=True,
                                 operand_dtype=jnp.float32)
    assert jnp.allclose(out, ref_f32, atol=3e-2, rtol=0.0), \
        "mismatch vs f32 reference (train)"

    # Eval mode (hard argmax one-hot ops).
    out_e = logic_layer_forward(x, weights, idx_a, idx_b, training=False)
    out_e = jax.block_until_ready(out_e)
    ref_e = _reference_forward(x, weights, idx_a, idx_b, training=False,
                               operand_dtype=jnp.bfloat16)
    assert jnp.allclose(out_e, ref_e, atol=1e-4, rtol=1e-4), \
        "mismatch vs reference (eval)"

    print("KERNEL_OK")
</pallas_src>

<mosaic_0001>
module attributes {stable_mosaic.version = 11 : i64} {
  func.func @_logic_kernel(%arg0: i32, %arg1: i32, %arg2: memref<8x64xbf16, #tpu.memory_space<vmem>>, %arg3: memref<1x256xi32, #tpu.memory_space<vmem>>, %arg4: memref<1x256xi32, #tpu.memory_space<vmem>>, %arg5: memref<4x256xf32, #tpu.memory_space<vmem>>, %arg6: memref<8x256xf32, #tpu.memory_space<vmem>>) attributes {dimension_semantics = [#tpu.dimension_semantics<parallel>, #tpu.dimension_semantics<parallel>], iteration_bounds = array<i64: 1, 1>, scalar_prefetch = 0 : i64, scratch_operands = 0 : i64, tpu.core_type = #tpu.core_type<tc>, window_params = [{transform_indices = @transform_0, window_bounds = array<i64: 8, 64>}, {transform_indices = @transform_1, window_bounds = array<i64: 1, 256>}, {transform_indices = @transform_2, window_bounds = array<i64: 1, 256>}, {transform_indices = @transform_3, window_bounds = array<i64: 4, 256>}, {transform_indices = @transform_4, window_bounds = array<i64: 8, 256>}]} {
    %c0 = arith.constant 0 : index
    %c0_0 = arith.constant 0 : index
    %0 = vector.load %arg2[%c0, %c0_0] : memref<8x64xbf16, #tpu.memory_space<vmem>>, vector<8x64xbf16>
    %1 = tpu.iota {dimensions = array<i32: 0>} : vector<64x256xi32>
    %c0_1 = arith.constant 0 : index
    %c0_2 = arith.constant 0 : index
    %2 = vector.load %arg3[%c0_1, %c0_2] : memref<1x256xi32, #tpu.memory_space<vmem>>, vector<1x256xi32>
    %3 = vector.broadcast %2 : vector<1x256xi32> to vector<64x256xi32>
    %4 = arith.cmpi eq, %1, %3 : vector<64x256xi32>
    %5 = arith.extui %4 : vector<64x256xi1> to vector<64x256xi32>
    %6 = arith.sitofp %5 : vector<64x256xi32> to vector<64x256xf32>
    %7 = arith.truncf %6 : vector<64x256xf32> to vector<64x256xbf16>
    %c0_3 = arith.constant 0 : index
    %c0_4 = arith.constant 0 : index
    %8 = vector.load %arg4[%c0_3, %c0_4] : memref<1x256xi32, #tpu.memory_space<vmem>>, vector<1x256xi32>
    %9 = vector.broadcast %8 : vector<1x256xi32> to vector<64x256xi32>
    %10 = arith.cmpi eq, %1, %9 : vector<64x256xi32>
    %11 = arith.extui %10 : vector<64x256xi1> to vector<64x256xi32>
    %12 = arith.sitofp %11 : vector<64x256xi32> to vector<64x256xf32>
    %13 = arith.truncf %12 : vector<64x256xf32> to vector<64x256xbf16>
    %cst = arith.constant dense<0.000000e+00> : vector<8x256xf32>
    %14 = tpu.matmul %0, %7, %cst {dimension_numbers = #tpu.dot_dimension_numbers<[1], [0], [0], [1], [0, 0, 1, 1], [], []>} : vector<8x64xbf16>, vector<64x256xbf16>, vector<8x256xf32> -> vector<8x256xf32>
    %cst_5 = arith.constant dense<0.000000e+00> : vector<8x256xf32>
    %15 = tpu.matmul %0, %13, %cst_5 {dimension_numbers = #tpu.dot_dimension_numbers<[1], [0], [0], [1], [0, 0, 1, 1], [], []>} : vector<8x64xbf16>, vector<64x256xbf16>, vector<8x256xf32> -> vector<8x256xf32>
    %c0_6 = arith.constant 0 : index
    %c0_7 = arith.constant 0 : index
    %16 = vector.load %arg5[%c0_6, %c0_7] : memref<4x256xf32, #tpu.memory_space<vmem>>, vector<4x256xf32>
    %17 = vector.extract_strided_slice %16 {offsets = [0, 0], sizes = [1, 256], strides = [1, 1]} : vector<4x256xf32> to vector<1x256xf32>
    %18 = vector.extract_strided_slice %16 {offsets = [1, 0], sizes = [1, 256], strides = [1, 1]} : vector<4x256xf32> to vector<1x256xf32>
    %19 = vector.broadcast %18 : vector<1x256xf32> to vector<8x256xf32>
    %20 = arith.mulf %19, %14 : vector<8x256xf32>
    %21 = vector.broadcast %17 : vector<1x256xf32> to vector<8x256xf32>
    %22 = arith.addf %21, %20 : vector<8x256xf32>
    %23 = vector.extract_strided_slice %16 {offsets = [2, 0], sizes = [1, 256], strides = [1, 1]} : vector<4x256xf32> to vector<1x256xf32>
    %24 = vector.broadcast %23 : vector<1x256xf32> to vector<8x256xf32>
    %25 = arith.mulf %24, %15 : vector<8x256xf32>
    %26 = arith.addf %22, %25 : vector<8x256xf32>
    %27 = vector.extract_strided_slice %16 {offsets = [3, 0], sizes = [1, 256], strides = [1, 1]} : vector<4x256xf32> to vector<1x256xf32>
    %28 = arith.mulf %14, %15 : vector<8x256xf32>
    %29 = vector.broadcast %27 : vector<1x256xf32> to vector<8x256xf32>
    %30 = arith.mulf %29, %28 : vector<8x256xf32>
    %31 = arith.addf %26, %30 : vector<8x256xf32>
    %c0_8 = arith.constant 0 : index
    %c0_9 = arith.constant 0 : index
    %32 = vector.load %arg6[%c0_8, %c0_9] : memref<8x256xf32, #tpu.memory_space<vmem>>, vector<8x256xf32>
    tpu.vector_store %arg6[%c0_8, %c0_9], %31 {strides = array<i32>} : memref<8x256xf32, #tpu.memory_space<vmem>>, vector<8x256xf32>,
    return
  }
  func.func @transform_0(%arg0: i32, %arg1: i32) -> (i32, i32) {
    %c0_i32 = arith.constant 0 : i32
    %c0_i32_0 = arith.constant 0 : i32
    return %arg0, %c0_i32 : i32, i32
  }
  func.func @transform_1(%arg0: i32, %arg1: i32) -> (i32, i32) {
    %c0_i32 = arith.constant 0 : i32
    %c0_i32_0 = arith.constant 0 : i32
    return %c0_i32, %arg1 : i32, i32
  }
  func.func @transform_2(%arg0: i32, %arg1: i32) -> (i32, i32) {
    %c0_i32 = arith.constant 0 : i32
    %c0_i32_0 = arith.constant 0 : i32
    return %c0_i32, %arg1 : i32, i32
  }
  func.func @transform_3(%arg0: i32, %arg1: i32) -> (i32, i32) {
    %c0_i32 = arith.constant 0 : i32
    %c0_i32_0 = arith.constant 0 : i32
    return %c0_i32, %arg1 : i32, i32
  }
  func.func @transform_4(%arg0: i32, %arg1: i32) -> (i32, i32) {
    %c0_i32 = arith.constant 0 : i32
    return %arg0, %arg1 : i32, i32
  }
}

</mosaic_0001>

<llo_original>
// kernel: tpu_custom_call.1
$region0: #{tpu_custom_call.1}
  #allocation0 [shape = 'u32[]', space=smem, size = 0x4, offset = 0x4, fixed_abs, tag = 'smem constant byte address 0x4 - core index']
  #allocation1 [shape = 'u32[144,128]{1,0:T(1,128)}', space=vmem, size = 0x12000, scoped, tag = 'internal scratch']
  %s0 = inlined_call_operand.hbm [shape: bf16[8,64], index: 0, kind: input, shape index: {}]
  %s1 = inlined_call_operand.hbm [shape: s32[1,256], index: 1, kind: input, shape index: {}]
  %s2 = inlined_call_operand.vmem [shape: s32[1,256], index: 2, kind: input, shape index: {}]
  %s3 = inlined_call_operand.hbm [shape: f32[4,256], index: 3, kind: input, shape index: {}]
  %s4 = inlined_call_operand.hbm [shape: f32[8,256], index: 4, kind: output, shape index: {}]
  %s5 = sld [smem:[#allocation0]]
  $region38: #{tpu_custom_call.1} parent=0
    _
  %s7 = ssub.s32 1, %s5
  %s8 = scalar_select 0, %s7, %s5
  $region1: #{tpu_custom_call.1} parent=0
    #allocation2 [shape = 'u8[2048]{0}', space=vmem, size = 0x800, scoped, tag = 'input window, operand 0, single buffered']
    #allocation3 [shape = 's32[1]{0}', space=sflag, size = 0x4, scoped, tag = 'scoped memory for tpu_custom_call.1']
    #allocation4 [shape = 's32[1]{0}', space=sflag, size = 0x4, scoped, tag = 'scoped memory for tpu_custom_call.1']
    #allocation5 [shape = 'u8[1024]{0}', space=vmem, size = 0x400, scoped, tag = 'input window, operand 1, single buffered']
    #allocation6 [shape = 's32[1]{0}', space=sflag, size = 0x4, scoped, tag = 'scoped memory for tpu_custom_call.1']
    #allocation7 [shape = 'u8[4096]{0}', space=vmem, size = 0x1000, scoped, tag = 'input window, operand 3, single buffered']
    #allocation8 [shape = 'u8[8192]{0}', space=vmem, size = 0x2000, scoped, tag = 'output window, operand 0, single buffered']
    %9 = vsyncpa [#allocation3], 0
    %10 = vsyncpa [#allocation6], 0
    %11 = vsyncpa [#allocation4], 0
    // Predicated region
    $region2: #{tpu_custom_call.1} parent=1 // pred_check
      _
    $region3: #{tpu_custom_call.1} parent=1 // pred_check_branch
      %13 = sbr.rel (0) target = $region5
    $region4: #{tpu_custom_call.1} parent=1 // pred_region
      %s15 = ssub.s32 64, 64
      %16 = vsyncadd [#allocation3], %s15
      %s18 = sshll.u32 [#allocation2], 4
      %s19 = int_to_ptr.vmem [resolvable:$true] %s18
      %21 = dma.hbm_to_vmem [thread:$0]  %s0, 64, %s19, [#allocation3]
    $region5: #{tpu_custom_call.1} parent=1 // pred_fallthru
      _
    // Predicated region
    $region6: #{tpu_custom_call.1} parent=1 // pred_check
      _
    $region7: #{tpu_custom_call.1} parent=1 // pred_check_branch
      %23 = sbr.rel (0) target = $region9
    $region8: #{tpu_custom_call.1} parent=1 // pred_region
      %s25 = ssub.s32 32, 32
      %26 = vsyncadd [#allocation6], %s25
      %s28 = sshll.u32 [#allocation5], 4
      %s29 = int_to_ptr.vmem [resolvable:$true] %s28
      %31 = dma.hbm_to_vmem [thread:$0]  %s1, 32, %s29, [#allocation6]
    $region9: #{tpu_custom_call.1} parent=1 // pred_fallthru
      _
    // Predicated region
    $region10: #{tpu_custom_call.1} parent=1 // pred_check
      _
    $region11: #{tpu_custom_call.1} parent=1 // pred_check_branch
      %33 = sbr.rel (0) target = $region13
    $region12: #{tpu_custom_call.1} parent=1 // pred_region
      _
    $region13: #{tpu_custom_call.1} parent=1 // pred_fallthru
      _
    // Predicated region
    $region14: #{tpu_custom_call.1} parent=1 // pred_check
      _
    $region15: #{tpu_custom_call.1} parent=1 // pred_check_branch
      %35 = sbr.rel (0) target = $region17
    $region16: #{tpu_custom_call.1} parent=1 // pred_region
      %s37 = ssub.s32 128, 128
      %38 = vsyncadd [#allocation6], %s37
      %s40 = sshll.u32 [#allocation7], 4
      %s41 = int_to_ptr.vmem [resolvable:$true] %s40
      %43 = dma.hbm_to_vmem [thread:$0]  %s3, 128, %s41, [#allocation6]
    $region17: #{tpu_custom_call.1} parent=1 // pred_fallthru
      _
    // Predicated region
    $region18: #{tpu_custom_call.1} parent=1 // pred_check
      _
    $region19: #{tpu_custom_call.1} parent=1 // pred_check_branch
      %45 = sbr.rel (0) target = $region21
    $region20: #{tpu_custom_call.1} parent=1 // pred_region
      %46 = dma.done [#allocation3], 64
    $region21: #{tpu_custom_call.1} parent=1 // pred_fallthru
      _
    // Predicated region
    $region22: #{tpu_custom_call.1} parent=1 // pred_check
      _
    $region23: #{tpu_custom_call.1} parent=1 // pred_check_branch
      %48 = sbr.rel (0) target = $region25
    $region24: #{tpu_custom_call.1} parent=1 // pred_region
      %49 = dma.done [#allocation6], 32
    $region25: #{tpu_custom_call.1} parent=1 // pred_fallthru
      _
    // Predicated region
    $region26: #{tpu_custom_call.1} parent=1 // pred_check
      _
    $region27: #{tpu_custom_call.1} parent=1 // pred_check_branch
      %51 = sbr.rel (0) target = $region29
    $region28: #{tpu_custom_call.1} parent=1 // pred_region
      %52 = dma.done [#allocation6], 128
    $region29: #{tpu_custom_call.1} parent=1 // pred_fallthru
      _
    %v54 = vld [vmem:[#allocation2] sm:$0xf]
    %v55 = vlaneseq
    %v56 = vshrl.u32 %v55, 7
    %v57 = vadd.s32 %v56, 8
    %v58 = vadd.s32 %v56, 16
    %v59 = vadd.s32 %v56, 24
    %v60 = vadd.s32 %v56, 32
    %v61 = vadd.s32 %v56, 40
    %v62 = vadd.s32 %v56, 48
    %v63 = vadd.s32 %v56, 56
    %v64 = vld [vmem:[#allocation5] sm:$0x3]
    %v65 = vlaneseq
    %v66 = vshrl.u32 %v65, 7
    %v67 = vsub.s32 0, %v66
    %v68 = vrot.slane %v64, %v67
    %v69 = vlaneseq
    %v70 = vshrl.u32 %v69, 7
    %v71 = vsub.s32 1, %v70
    %v72 = vrot.slane %v64, %v71
    %vm73 = vcmp.eq.s32.totalorder %v56, %v68
    %vm74 = vcmp.eq.s32.totalorder %v56, %v72
    %vm75 = vcmp.eq.s32.totalorder %v57, %v68
    %vm76 = vcmp.eq.s32.totalorder %v57, %v72
    %vm77 = vcmp.eq.s32.totalorder %v58, %v68
    %vm78 = vcmp.eq.s32.totalorder %v58, %v72
    %vm79 = vcmp.eq.s32.totalorder %v59, %v68
    %vm80 = vcmp.eq.s32.totalorder %v59, %v72
    %vm81 = vcmp.eq.s32.totalorder %v60, %v68
    %vm82 = vcmp.eq.s32.totalorder %v60, %v72
    %vm83 = vcmp.eq.s32.totalorder %v61, %v68
    %vm84 = vcmp.eq.s32.totalorder %v61, %v72
    %vm85 = vcmp.eq.s32.totalorder %v62, %v68
    %vm86 = vcmp.eq.s32.totalorder %v62, %v72
    %vm87 = vcmp.eq.s32.totalorder %v63, %v68
    %vm88 = vcmp.eq.s32.totalorder %v63, %v72
    %v89 = vsel %vm73, 1, 0
    %v90 = vsel %vm74, 1, 0
    %v91 = vsel %vm75, 1, 0
    %v92 = vsel %vm76, 1, 0
    %v93 = vsel %vm77, 1, 0
    %v94 = vsel %vm78, 1, 0
    %v95 = vsel %vm79, 1, 0
    %v96 = vsel %vm80, 1, 0
    %v97 = vsel %vm81, 1, 0
    %v98 = vsel %vm82, 1, 0
    %v99 = vsel %vm83, 1, 0
    %v100 = vsel %vm84, 1, 0
    %v101 = vsel %vm85, 1, 0
    %v102 = vsel %vm86, 1, 0
    %v103 = vsel %vm87, 1, 0
    %v104 = vsel %vm88, 1, 0
    %v105 = vcvt.s32.f32 %v89
    %v106 = vcvt.s32.f32 %v90
    %v107 = vcvt.s32.f32 %v91
    %v108 = vcvt.s32.f32 %v92
    %v109 = vcvt.s32.f32 %v93
    %v110 = vcvt.s32.f32 %v94
    %v111 = vcvt.s32.f32 %v95
    %v112 = vcvt.s32.f32 %v96
    %v113 = vcvt.s32.f32 %v97
    %v114 = vcvt.s32.f32 %v98
    %v115 = vcvt.s32.f32 %v99
    %v116 = vcvt.s32.f32 %v100
    %v117 = vcvt.s32.f32 %v101
    %v118 = vcvt.s32.f32 %v102
    %v119 = vcvt.s32.f32 %v103
    %v120 = vcvt.s32.f32 %v104
    %v121 = vpack.c.bf16 %v107, %v105
    %v122 = vpack.c.bf16 %v108, %v106
    %v123 = vpack.c.bf16 %v111, %v109
    %v124 = vpack.c.bf16 %v112, %v110
    %v125 = vpack.c.bf16 %v115, %v113
    %v126 = vpack.c.bf16 %v116, %v114
    %v127 = vpack.c.bf16 %v119, %v117
    %v128 = vpack.c.bf16 %v120, %v118
    %v129 = vld [vmem:[%s2] sm:$0x3]
    %v130 = vlaneseq
    %v131 = vshrl.u32 %v130, 7
    %v132 = vsub.s32 0, %v131
    %v133 = vrot.slane %v129, %v132
    %v134 = vlaneseq
    %v135 = vshrl.u32 %v134, 7
    %v136 = vsub.s32 1, %v135
    %v137 = vrot.slane %v129, %v136
    %vm138 = vcmp.eq.s32.totalorder %v56, %v133
    %vm139 = vcmp.eq.s32.totalorder %v56, %v137
    %vm140 = vcmp.eq.s32.totalorder %v57, %v133
    %vm141 = vcmp.eq.s32.totalorder %v57, %v137
    %vm142 = vcmp.eq.s32.totalorder %v58, %v133
    %vm143 = vcmp.eq.s32.totalorder %v58, %v137
    %vm144 = vcmp.eq.s32.totalorder %v59, %v133
    %vm145 = vcmp.eq.s32.totalorder %v59, %v137
    %vm146 = vcmp.eq.s32.totalorder %v60, %v133
    %vm147 = vcmp.eq.s32.totalorder %v60, %v137
    %vm148 = vcmp.eq.s32.totalorder %v61, %v133
    %vm149 = vcmp.eq.s32.totalorder %v61, %v137
    %vm150 = vcmp.eq.s32.totalorder %v62, %v133
    %vm151 = vcmp.eq.s32.totalorder %v62, %v137
    %vm152 = vcmp.eq.s32.totalorder %v63, %v133
    %vm153 = vcmp.eq.s32.totalorder %v63, %v137
    %v154 = vsel %vm138, 1, 0
    %v155 = vsel %vm139, 1, 0
    %v156 = vsel %vm140, 1, 0
    %v157 = vsel %vm141, 1, 0
    %v158 = vsel %vm142, 1, 0
    %v159 = vsel %vm143, 1, 0
    %v160 = vsel %vm144, 1, 0
    %v161 = vsel %vm145, 1, 0
    %v162 = vsel %vm146, 1, 0
    %v163 = vsel %vm147, 1, 0
    %v164 = vsel %vm148, 1, 0
    %v165 = vsel %vm149, 1, 0
    %v166 = vsel %vm150, 1, 0
    %v167 = vsel %vm151, 1, 0
    %v168 = vsel %vm152, 1, 0
    %v169 = vsel %vm153, 1, 0
    %v170 = vcvt.s32.f32 %v154
    %v171 = vcvt.s32.f32 %v155
    %v172 = vcvt.s32.f32 %v156
    %v173 = vcvt.s32.f32 %v157
    %v174 = vcvt.s32.f32 %v158
    %v175 = vcvt.s32.f32 %v159
    %v176 = vcvt.s32.f32 %v160
    %v177 = vcvt.s32.f32 %v161
    %v178 = vcvt.s32.f32 %v162
    %v179 = vcvt.s32.f32 %v163
    %v180 = vcvt.s32.f32 %v164
    %v181 = vcvt.s32.f32 %v165
    %v182 = vcvt.s32.f32 %v166
    %v183 = vcvt.s32.f32 %v167
    %v184 = vcvt.s32.f32 %v168
    %v185 = vcvt.s32.f32 %v169
    %v186 = vpack.c.bf16 %v172, %v170
    %v187 = vpack.c.bf16 %v173, %v171
    %v188 = vpack.c.bf16 %v176, %v174
    %v189 = vpack.c.bf16 %v177, %v175
    %v190 = vpack.c.bf16 %v180, %v178
    %v191 = vpack.c.bf16 %v181, %v179
    %v192 = vpack.c.bf16 %v184, %v182
    %v193 = vpack.c.bf16 %v185, %v183
    %vm194 = vcmask 523264
    %v196 = vsel %vm194, %v54, 0
    %198 = vmatprep.subr.bf16.mxu0 0
    %199 = vmatpush1.bf16.msra.mxu0 0
    %200 = vmatprep.subr.bf16.mxu0 0
    %201 = vmatpush1.bf16.msra.mxu0 0
    %202 = vmatprep.subr.bf16.mxu0 0
    %203 = vmatpush1.bf16.msra.mxu0 0
    %204 = vmatprep.subr.bf16.mxu0 0
    %205 = vmatpush1.bf16.msra.mxu0 0
    %206 = vmatprep.subr.bf16.mxu0 %v128
    %207 = vmatpush1.bf16.msra.mxu0 %v127
    %208 = vmatprep.subr.bf16.mxu0 %v126
    %209 = vmatpush1.bf16.msra.mxu0 %v125
    %210 = vmatprep.subr.bf16.mxu0 %v124
    %211 = vmatpush1.bf16.msra.mxu0 %v123
    %212 = vmatprep.subr.bf16.mxu0 %v122
    %213 = vmatpush1.bf16.msra.mxu0 %v121
    %214 = vmatprep.subr.bf16.mxu0 0
    %215 = vmatpush2.bf16.msra.mxu0 0
    %216 = vmatprep.subr.bf16.mxu0 0
    %217 = vmatpush2.bf16.msra.mxu0 0
    %218 = vmatprep.subr.bf16.mxu0 0
    %219 = vmatpush2.bf16.msra.mxu0 0
    %220 = vmatprep.subr.bf16.mxu0 0
    %221 = vmatpush2.bf16.msra.mxu0 0
    %222 = vmatprep.subr.bf16.mxu0 0
    %223 = vmatpush2.bf16.msra.mxu0 0
    %224 = vmatprep.subr.bf16.mxu0 0
    %225 = vmatpush2.bf16.msra.mxu0 0
    %226 = vmatprep.subr.bf16.mxu0 0
    %227 = vmatpush2.bf16.msra.mxu0 0
    %228 = vmatprep.subr.bf16.mxu0 0
    %229 = vmatpush2.bf16.msra.mxu0 0
    %230 = vmatprep.mubr.bf16.mxu0 0
    %231 = vmatmul.mubr.bf16.gmra.mxu0 %v196
    %v232 = vpop.f32.mrf.mxu0
    %v233 = vadd.f32 0.0, %v232
    %v234 = vpop.f32.mrf.mxu0
    %v235 = vadd.f32 0.0, %v234
    %v236 = vpop.f32.mrf.mxu0
    %v237 = vpop.f32.mrf.mxu0
    %238 = vdwg.mxu0
    %239 = vmatprep.subr.bf16.mxu0 0
    %240 = vmatpush1.bf16.msra.mxu0 0
    %241 = vmatprep.subr.bf16.mxu0 0
    %242 = vmatpush1.bf16.msra.mxu0 0
    %243 = vmatprep.subr.bf16.mxu0 0
    %244 = vmatpush1.bf16.msra.mxu0 0
    %245 = vmatprep.subr.bf16.mxu0 0
    %246 = vmatpush1.bf16.msra.mxu0 0
    %247 = vmatprep.subr.bf16.mxu0 %v193
    %248 = vmatpush1.bf16.msra.mxu0 %v192
    %249 = vmatprep.subr.bf16.mxu0 %v191
    %250 = vmatpush1.bf16.msra.mxu0 %v190
    %251 = vmatprep.subr.bf16.mxu0 %v189
    %252 = vmatpush1.bf16.msra.mxu0 %v188
    %253 = vmatprep.subr.bf16.mxu0 %v187
    %254 = vmatpush1.bf16.msra.mxu0 %v186
    %255 = vmatprep.subr.bf16.mxu0 0
    %256 = vmatpush2.bf16.msra.mxu0 0
    %257 = vmatprep.subr.bf16.mxu0 0
    %258 = vmatpush2.bf16.msra.mxu0 0
    %259 = vmatprep.subr.bf16.mxu0 0
    %260 = vmatpush2.bf16.msra.mxu0 0
    %261 = vmatprep.subr.bf16.mxu0 0
    %262 = vmatpush2.bf16.msra.mxu0 0
    %263 = vmatprep.subr.bf16.mxu0 0
    %264 = vmatpush2.bf16.msra.mxu0 0
    %265 = vmatprep.subr.bf16.mxu0 0
    %266 = vmatpush2.bf16.msra.mxu0 0
    %267 = vmatprep.subr.bf16.mxu0 0
    %268 = vmatpush2.bf16.msra.mxu0 0
    %269 = vmatprep.subr.bf16.mxu0 0
    %270 = vmatpush2.bf16.msra.mxu0 0
    %271 = vmatprep.mubr.bf16.mxu0 0
    %272 = vmatmul.mubr.bf16.gmra.mxu0 %v196
    %v273 = vpop.f32.mrf.mxu0
    %v274 = vadd.f32 0.0, %v273
    %v275 = vpop.f32.mrf.mxu0
    %v276 = vadd.f32 0.0, %v275
    %v277 = vpop.f32.mrf.mxu0
    %v278 = vpop.f32.mrf.mxu0
    %279 = vdwg.mxu0
    %v280 = vld [vmem:[#allocation7] sm:$0xff]
    %v282 = vlaneseq
    %v283 = vshrl.u32 %v282, 7
    %v284 = vsub.s32 1, %v283
    %v285 = vrot.slane %v280, %v284
    %v286 = vlaneseq
    %v287 = vshrl.u32 %v286, 7
    %v288 = vsub.s32 5, %v287
    %v289 = vrot.slane %v280, %v288
    %v292 = vlaneseq
    %v293 = vshrl.u32 %v292, 7
    %v294 = vsub.s32 1, %v293
    %v295 = vrot.slane %v285, %v294
    %v296 = vlaneseq
    %v297 = vshrl.u32 %v296, 7
    %v298 = vsub.s32 1, %v297
    %v299 = vrot.slane %v289, %v298
    %v300 = vmul.f32 %v295, %v233
    %v301 = vmul.f32 %v299, %v235
    %v302 = vlaneseq
    %v303 = vshrl.u32 %v302, 7
    %v304 = vsub.s32 0, %v303
    %v305 = vrot.slane %v280, %v304
    %v306 = vlaneseq
    %v307 = vshrl.u32 %v306, 7
    %v308 = vsub.s32 4, %v307
    %v309 = vrot.slane %v280, %v308
    %v312 = vlaneseq
    %v313 = vshrl.u32 %v312, 7
    %v314 = vsub.s32 0, %v313
    %v315 = vrot.slane %v305, %v314
    %v316 = vlaneseq
    %v317 = vshrl.u32 %v316, 7
    %v318 = vsub.s32 0, %v317
    %v319 = vrot.slane %v309, %v318
    %v320 = vadd.f32 %v315, %v300
    %v321 = vadd.f32 %v319, %v301
    %v322 = vlaneseq
    %v323 = vshrl.u32 %v322, 7
    %v324 = vsub.s32 2, %v323
    %v325 = vrot.slane %v280, %v324
    %v326 = vlaneseq
    %v327 = vshrl.u32 %v326, 7
    %v328 = vsub.s32 6, %v327
    %v329 = vrot.slane %v280, %v328
    %v332 = vlaneseq
    %v333 = vshrl.u32 %v332, 7
    %v334 = vsub.s32 2, %v333
    %v335 = vrot.slane %v325, %v334
    %v336 = vlaneseq
    %v337 = vshrl.u32 %v336, 7
    %v338 = vsub.s32 2, %v337
    %v339 = vrot.slane %v329, %v338
    %v340 = vmul.f32 %v335, %v274
    %v341 = vmul.f32 %v339, %v276
    %v342 = vadd.f32 %v320, %v340
    %v343 = vadd.f32 %v321, %v341
    %v344 = vmul.f32 %v233, %v274
    %v345 = vmul.f32 %v235, %v276
    %v346 = vlaneseq
    %v347 = vshrl.u32 %v346, 7
    %v348 = vsub.s32 3, %v347
    %v349 = vrot.slane %v280, %v348
    %v350 = vlaneseq
    %v351 = vshrl.u32 %v350, 7
    %v352 = vsub.s32 7, %v351
    %v353 = vrot.slane %v280, %v352
    %v356 = vlaneseq
    %v357 = vshrl.u32 %v356, 7
    %v358 = vsub.s32 3, %v357
    %v359 = vrot.slane %v349, %v358
    %v360 = vlaneseq
    %v361 = vshrl.u32 %v360, 7
    %v362 = vsub.s32 3, %v361
    %v363 = vrot.slane %v353, %v362
    %v364 = vmul.f32 %v359, %v344
    %v365 = vmul.f32 %v363, %v345
    %v366 = vadd.f32 %v342, %v364
    %v367 = vadd.f32 %v343, %v365
    %368 = vst [vmem:[#allocation8] sm:$0xff] %v366
    %369 = vst [vmem:[#allocation8 + $0x8] sm:$0xff] %v367
    // Predicated region
    $region30: #{tpu_custom_call.1} parent=1 // pred_check
      _
    $region31: #{tpu_custom_call.1} parent=1 // pred_check_branch
      %371 = sbr.rel (0) target = $region33
    $region32: #{tpu_custom_call.1} parent=1 // pred_region
      %s373 = ssub.s32 256, 256
      %374 = vsyncadd [#allocation4], %s373
      %s376 = sshll.u32 [#allocation8], 4
      %s377 = int_to_ptr.vmem [resolvable:$true] %s376
      %379 = dma.vmem_to_hbm [thread:$0]  %s377, 256, %s4, [#allocation4]
    $region33: #{tpu_custom_call.1} parent=1 // pred_fallthru
      _
    // Predicated region
    $region34: #{tpu_custom_call.1} parent=1 // pred_check
      _
    $region35: #{tpu_custom_call.1} parent=1 // pred_check_branch
      %381 = sbr.rel (0) target = $region37
    $region36: #{tpu_custom_call.1} parent=1 // pred_region
      %382 = dma.done [#allocation4], 256
    $region37: #{tpu_custom_call.1} parent=1 // pred_fallthru
      _
    %383 = vsyncpa [#allocation3], 1
    %384 = vsyncpa [#allocation6], 1
    %385 = vsyncpa [#allocation4], 1

</llo_original>
